<compile_context>
chip_gen: v6e
topology: v6e:2x2x1
jax: 0.10.0
libtpu: 0.0.40
codegen_flags: <defaults>
</compile_context>

<pallas_src>
import functools

import jax
import jax.numpy as jnp
from jax.experimental import pallas as pl
from jax.experimental.pallas import tpu as pltpu

ALPHA = 0.3
GAMMA = 2.0  # exploited as an explicit square (w * w) in-kernel

_VMEM_LIMIT_BYTES = 32 * 1024 * 1024    # raise v5e's 16 MiB scoped default; safe on v6e/v7x
_WORKING_SET_BUDGET = 16 * 1024 * 1024  # per-grid-step target (inputs x2 + f32 temporaries)


def _round_up(x, m):
    return ((x + m - 1) // m) * m


def _choose_tile_n(n, c, itemsize):
    """Pick the batch-tile size from the *working set*, not the raw input tile.

    Per element: 2 * itemsize (double-buffered native-dtype input) plus ~5
    same-shape f32 temporaries (upcast logits, shifted, exp_shifted, select,
    slack).  This keeps the step well inside v7x's 64 MiB physical VMEM and
    v5e's scoped limit once raised via vmem_limit_bytes.
    """
    if n <= 8:
        return n
    per_row = max(1, c * (2 * itemsize + 5 * 4))
    max_rows = max(8, _WORKING_SET_BUDGET // per_row)
    max_rows = max(8, (max_rows // 8) * 8)
    tile = min(_round_up(n, 8), max_rows)
    # Keep at least 2 grid steps so the "parallel" axis can shard across both
    # v7x TensorCores (harmless no-op on single-TC v5e/v6e).
    if n >= 16:
        tile = min(tile, _round_up(pl.cdiv(n, 2), 8))
    return max(8, (tile // 8) * 8)


def _focal_loss_kernel(scores_ref, labels_ref, out_ref, *, n_valid, tile_n, needs_mask):
    i = pl.program_id(0)

    logits = scores_ref[...].astype(jnp.float32)               # (TILE_N, C) f32 upcast in-kernel
    labels = labels_ref[...]                                   # (TILE_N, 1) int32
    tn, c = logits.shape

    # numerically-stable log-sum-exp
    m = jnp.max(logits, axis=-1, keepdims=True)
    shifted = logits - m
    exp_shifted = jnp.exp(shifted)                              # (TILE_N, C)
    sumexp = jnp.sum(exp_shifted, axis=-1, keepdims=True)       # (TILE_N, 1)

    # target logit via select -- no materialized f32 one-hot, no extra (TILE_N, C) mul
    class_ids = jax.lax.broadcasted_iota(jnp.int32, (tn, c), 1)
    target_shifted = jnp.sum(
        jnp.where(class_ids == labels, shifted, 0.0), axis=-1, keepdims=True)

    ce = jnp.log(sumexp) - target_shifted                       # (TILE_N, 1), >= 0
    pt = jnp.exp(-ce)                                           # softmax prob of target class
    w = 1.0 - pt
    focal = ALPHA * (w * w) * ce                                # gamma == 2 -> one mul, no pow

    if needs_mask:
        # Zero rows past the real batch (last, partial tile).  jnp.where is a
        # select, so garbage-row NaN/Inf from the unpadded read cannot propagate.
        row = i * tile_n + jax.lax.broadcasted_iota(jnp.int32, (tn, 1), 0)
        focal = jnp.where(row < n_valid, focal, 0.0)

    # Sublane/lane-dense (1, 8, 128) partial-sum slab, value replicated everywhere,
    # so the store is a plain unmasked vst.
    partial = jnp.sum(focal, axis=0, keepdims=True)             # (1, 1)
    out_ref[...] = jnp.broadcast_to(partial.reshape(1, 1, 1), out_ref.shape)


def loss_for_tirlighet_net(scores, labels):
    """Pallas equivalent of loss_for_tirlighetNet.forward(scores, labels)."""
    n, c = scores.shape
    labels2d = labels.astype(jnp.int32).reshape(n, 1)

    itemsize = jnp.dtype(scores.dtype).itemsize
    tile_n = _choose_tile_n(n, c, itemsize)
    num_tiles = pl.cdiv(n, tile_n)          # no wrapper-side jnp.pad: avoids an extra HBM pass

    kernel = functools.partial(
        _focal_loss_kernel,
        n_valid=n,
        tile_n=tile_n,
        needs_mask=(n % tile_n != 0),
    )

    cost = pl.CostEstimate(
        flops=int(7 * n * c),
        transcendentals=int(n * (c + 1)),
        bytes_accessed=int(n * c * itemsize + n * 4 + num_tiles * 8 * 128 * 4),
    )

    partials = pl.pallas_call(
        kernel,
        out_shape=jax.ShapeDtypeStruct((num_tiles, 8, 128), jnp.float32),
        grid=(num_tiles,),
        in_specs=[
            pl.BlockSpec((tile_n, c), lambda i: (i, 0)),        # scores, native dtype
            pl.BlockSpec((tile_n, 1), lambda i: (i, 0)),        # labels (int32)
        ],
        out_specs=pl.BlockSpec((1, 8, 128), lambda i: (i, 0, 0)),
        compiler_params=pltpu.CompilerParams(
            dimension_semantics=("parallel",),
            vmem_limit_bytes=_VMEM_LIMIT_BYTES,
        ),
        cost_estimate=cost,
    )(scores, labels2d)

    # Each tile's partial sum is replicated across its (8, 128) slab; take [0, 0].
    return jnp.sum(partials[:, 0, 0]) / jnp.float32(n)


def _reference(scores, labels):
    # pure-JAX reference (mirrors F.cross_entropy reduction='none' + focal weighting, mean)
    logp = jax.nn.log_softmax(scores.astype(jnp.float32), axis=-1)
    ce = -jnp.take_along_axis(logp, labels[:, None].astype(jnp.int32), axis=-1)[:, 0]
    pt = jnp.exp(-ce)
    focal = ALPHA * (1.0 - pt) ** GAMMA * ce
    return jnp.mean(focal)


if __name__ == "__main__":
    key = jax.random.PRNGKey(0)

    # Case 1: small, divisible batch (matches the module's (N, C) logits + labels).
    k1, k2 = jax.random.split(key)
    N, C = 8, 32
    scores = jax.random.normal(k1, (N, C), dtype=jnp.float32)
    labels = jax.random.randint(k2, (N,), 0, C, dtype=jnp.int32)

    loss = jax.block_until_ready(loss_for_tirlighet_net(scores, labels))
    ref = _reference(scores, labels)
    assert jnp.allclose(loss, ref, atol=1e-5, rtol=1e-5), (loss, ref)

    # Case 2: non-divisible batch -> exercises the cdiv grid + in-kernel row mask.
    k3, k4 = jax.random.split(k1)
    N2, C2 = 20, 32
    scores2 = jax.random.normal(k3, (N2, C2), dtype=jnp.float32)
    labels2 = jax.random.randint(k4, (N2,), 0, C2, dtype=jnp.int32)

    loss2 = jax.block_until_ready(loss_for_tirlighet_net(scores2, labels2))
    ref2 = _reference(scores2, labels2)
    assert jnp.allclose(loss2, ref2, atol=1e-5, rtol=1e-5), (loss2, ref2)

    print("KERNEL_OK")
</pallas_src>

<mosaic_0001>
module attributes {stable_mosaic.version = 11 : i64} {
  func.func @_focal_loss_kernel(%arg0: i32, %arg1: memref<8x32xf32, #tpu.memory_space<vmem>>, %arg2: memref<8x1xi32, #tpu.memory_space<vmem>>, %arg3: memref<1x8x128xf32, #tpu.memory_space<vmem>>) attributes {dimension_semantics = [#tpu.dimension_semantics<parallel>], iteration_bounds = array<i64: 1>, scalar_prefetch = 0 : i64, scratch_operands = 0 : i64, tpu.core_type = #tpu.core_type<tc>, window_params = [{transform_indices = @transform_0, window_bounds = array<i64: 8, 32>}, {transform_indices = @transform_1, window_bounds = array<i64: 8, 1>}, {transform_indices = @transform_2, window_bounds = array<i64: 1, 8, 128>}]} {
    %c0 = arith.constant 0 : index
    %c0_0 = arith.constant 0 : index
    %0 = vector.load %arg1[%c0, %c0_0] : memref<8x32xf32, #tpu.memory_space<vmem>>, vector<8x32xf32>
    %c0_1 = arith.constant 0 : index
    %c0_2 = arith.constant 0 : index
    %1 = vector.load %arg2[%c0_1, %c0_2] : memref<8x1xi32, #tpu.memory_space<vmem>>, vector<8x1xi32>
    %cst = arith.constant dense<0xFF800000> : vector<8xf32>
    %2 = vector.multi_reduction <maximumf>, %0, %cst [1] : vector<8x32xf32> to vector<8xf32>
    %3 = vector.shape_cast %2 : vector<8xf32> to vector<8x1xf32>
    %4 = vector.broadcast %3 : vector<8x1xf32> to vector<8x32xf32>
    %5 = arith.subf %0, %4 : vector<8x32xf32>
    %6 = math.exp %5 : vector<8x32xf32>
    %cst_3 = arith.constant dense<0.000000e+00> : vector<8xf32>
    %7 = vector.multi_reduction <add>, %6, %cst_3 [1] : vector<8x32xf32> to vector<8xf32>
    %8 = vector.shape_cast %7 : vector<8xf32> to vector<8x1xf32>
    %9 = tpu.iota {dimensions = array<i32: 1>} : vector<8x32xi32>
    %10 = vector.broadcast %1 : vector<8x1xi32> to vector<8x32xi32>
    %11 = arith.cmpi eq, %9, %10 : vector<8x32xi32>
    %cst_4 = arith.constant 0.000000e+00 : f32
    %12 = vector.broadcast %cst_4 : f32 to vector<8x32xf32>
    %13 = arith.select %11, %5, %12 : vector<8x32xi1>, vector<8x32xf32>
    %cst_5 = arith.constant dense<0.000000e+00> : vector<8xf32>
    %14 = vector.multi_reduction <add>, %13, %cst_5 [1] : vector<8x32xf32> to vector<8xf32>
    %15 = vector.shape_cast %14 : vector<8xf32> to vector<8x1xf32>
    %16 = math.log %8 : vector<8x1xf32>
    %17 = arith.subf %16, %15 : vector<8x1xf32>
    %cst_6 = arith.constant 0.000000e+00 : f32
    %18 = vector.broadcast %cst_6 : f32 to vector<8x1xf32>
    %19 = arith.subf %18, %17 : vector<8x1xf32>
    %20 = math.exp %19 : vector<8x1xf32>
    %cst_7 = arith.constant 1.000000e+00 : f32
    %21 = vector.broadcast %cst_7 : f32 to vector<8x1xf32>
    %22 = arith.subf %21, %20 : vector<8x1xf32>
    %23 = arith.mulf %22, %22 : vector<8x1xf32>
    %cst_8 = arith.constant 3.000000e-01 : f32
    %24 = vector.broadcast %cst_8 : f32 to vector<8x1xf32>
    %25 = arith.mulf %24, %23 : vector<8x1xf32>
    %26 = arith.mulf %25, %17 : vector<8x1xf32>
    %cst_9 = arith.constant dense<0.000000e+00> : vector<1xf32>
    %27 = vector.multi_reduction <add>, %26, %cst_9 [0] : vector<8x1xf32> to vector<1xf32>
    %28 = vector.shape_cast %27 : vector<1xf32> to vector<1x1xf32>
    %29 = vector.shape_cast %28 : vector<1x1xf32> to vector<1x1x1xf32>
    %30 = vector.shape_cast %29 : vector<1x1x1xf32> to vector<1x1x1xf32>
    %31 = vector.broadcast %30 : vector<1x1x1xf32> to vector<1x8x128xf32>
    %c0_10 = arith.constant 0 : index
    %c0_11 = arith.constant 0 : index
    %c0_12 = arith.constant 0 : index
    %32 = vector.load %arg3[%c0_10, %c0_11, %c0_12] : memref<1x8x128xf32, #tpu.memory_space<vmem>>, vector<1x8x128xf32>
    tpu.vector_store %arg3[%c0_10, %c0_11, %c0_12], %31 {strides = array<i32>} : memref<1x8x128xf32, #tpu.memory_space<vmem>>, vector<1x8x128xf32>,
    return
  }
  func.func @transform_0(%arg0: i32) -> (i32, i32) {
    %c0_i32 = arith.constant 0 : i32
    %c0_i32_0 = arith.constant 0 : i32
    return %arg0, %c0_i32 : i32, i32
  }
  func.func @transform_1(%arg0: i32) -> (i32, i32) {
    %c0_i32 = arith.constant 0 : i32
    %c0_i32_0 = arith.constant 0 : i32
    return %arg0, %c0_i32 : i32, i32
  }
  func.func @transform_2(%arg0: i32) -> (i32, i32, i32) {
    %c0_i32 = arith.constant 0 : i32
    %c0_i32_0 = arith.constant 0 : i32
    %c0_i32_1 = arith.constant 0 : i32
    return %arg0, %c0_i32, %c0_i32_0 : i32, i32, i32
  }
}

</mosaic_0001>

<llo_original>
// kernel: tpu_custom_call.1
$region0: #{tpu_custom_call.1}
  #allocation0 [shape = 'u32[]', space=smem, size = 0x4, offset = 0x4, fixed_abs, tag = 'smem constant byte address 0x4 - core index']
  #allocation1 [shape = 'u32[144,128]{1,0:T(1,128)}', space=vmem, size = 0x12000, scoped, tag = 'internal scratch']
  %s0 = inlined_call_operand.vmem [shape: f32[8,32], index: 0, kind: input, shape index: {}]
  %s1 = inlined_call_operand.vmem [shape: s32[8,1], index: 1, kind: input, shape index: {}]
  %s2 = inlined_call_operand.hbm [shape: f32[1,8,128], index: 2, kind: output, shape index: {}]
  %s3 = sld [smem:[#allocation0]]
  $region18: #{tpu_custom_call.1} parent=0
    _
  %s5 = ssub.s32 1, %s3
  %s6 = scalar_select 0, %s5, %s3
  $region1: #{tpu_custom_call.1} parent=0
    #allocation2 [shape = 'u8[4096]{0}', space=vmem, size = 0x1000, scoped, tag = 'output window, operand 0, single buffered']
    #allocation3 [shape = 's32[1]{0}', space=sflag, size = 0x4, scoped, tag = 'scoped memory for tpu_custom_call.1']
    %7 = vsyncpa [#allocation3], 0
    // Predicated region
    $region2: #{tpu_custom_call.1} parent=1 // pred_check
      _
    $region3: #{tpu_custom_call.1} parent=1 // pred_check_branch
      %9 = sbr.rel (0) target = $region5
    $region4: #{tpu_custom_call.1} parent=1 // pred_region
      _
    $region5: #{tpu_custom_call.1} parent=1 // pred_fallthru
      _
    // Predicated region
    $region6: #{tpu_custom_call.1} parent=1 // pred_check
      _
    $region7: #{tpu_custom_call.1} parent=1 // pred_check_branch
      %11 = sbr.rel (0) target = $region9
    $region8: #{tpu_custom_call.1} parent=1 // pred_region
      _
    $region9: #{tpu_custom_call.1} parent=1 // pred_fallthru
      _
    %v12 = vld [vmem:[%s0] sm:$0xff]
    %v13 = vld [vmem:[%s1] sm:$0xff]
    %vm14 = vcmask 261120
    %v15 = vsel %vm14, %v12, -inf
    %16 = vmax.xlane.f32.xlu0 %v15
    %v17 = vpop.xlane.xlu0 %16
    %v18 = vsub.f32 %v12, %v17
    %v19 = vmul.f32 %v18, 1.442695
    %v20 = vpow.pop %v19
    %v21 = vsel %vm14, %v20, 0.0
    %22 = vadd.xlane.f32.xlu0 %v21
    %v23 = vpop.xlane.xlu0 %22
    %v24 = vlaneseq
    %v25 = vand.u32 %v24, 127
    %26 = vset.pattern.permute.xlu0 0
    %27 = vperm.xlu0 %26, %v13
    %v28 = vpop.permute.xlu0 %27
    %vm29 = vcmp.eq.s32.totalorder %v25, %v28
    %v30 = vsel %vm29, %v18, 0.0
    %v31 = vsel %vm14, %v30, 0.0
    %32 = vadd.xlane.f32.xlu0 %v31
    %v33 = vpop.xlane.xlu0 %32
    %v34 = vlog2.pop %v23
    %v35 = vmul.f32 %v34, 0.6931472
    %v36 = vsub.f32 %v35, %v33
    %v37 = vsub.f32 0.0, %v36
    %v38 = vmul.f32 %v37, 1.442695
    %v39 = vpow.pop %v38
    %v40 = vsub.f32 1.0, %v39
    %v41 = vmul.f32 %v40, %v40
    %v42 = vmul.f32 %v41, 0.3
    %v43 = vmul.f32 %v42, %v36
    %v44 = vrot.slane %v43, 4
    %v45 = vadd.f32 %v43, %v44
    %v46 = vrot.slane %v45, 2
    %v47 = vadd.f32 %v45, %v46
    %v48 = vrot.slane %v47, 1
    %v49 = vadd.f32 %v47, %v48
    %50 = vst [vmem:[#allocation2] sm:$0xff] %v49
    // Predicated region
    $region10: #{tpu_custom_call.1} parent=1 // pred_check
      _
    $region11: #{tpu_custom_call.1} parent=1 // pred_check_branch
      %52 = sbr.rel (0) target = $region13
    $region12: #{tpu_custom_call.1} parent=1 // pred_region
      %s54 = ssub.s32 128, 128
      %55 = vsyncadd [#allocation3], %s54
      %s57 = sshll.u32 [#allocation2], 4
      %s58 = int_to_ptr.vmem [resolvable:$true] %s57
      %60 = dma.vmem_to_hbm [thread:$0]  %s58, 128, %s2, [#allocation3]
    $region13: #{tpu_custom_call.1} parent=1 // pred_fallthru
      _
    // Predicated region
    $region14: #{tpu_custom_call.1} parent=1 // pred_check
      _
    $region15: #{tpu_custom_call.1} parent=1 // pred_check_branch
      %62 = sbr.rel (0) target = $region17
    $region16: #{tpu_custom_call.1} parent=1 // pred_region
      %63 = dma.done [#allocation3], 128
    $region17: #{tpu_custom_call.1} parent=1 // pred_fallthru
      _
    %64 = vsyncpa [#allocation3], 1

</llo_original>
